<compile_context>
chip_gen: v7x
topology: tpu7x:2x2x1
jax: 0.10.0
libtpu: 0.0.40
codegen_flags: <defaults>
</compile_context>

<pallas_src>
import functools

import jax
import jax.numpy as jnp
from jax.experimental import pallas as pl
from jax.experimental.pallas import tpu as pltpu  # noqa: F401  (TPU backend)

LANE = 128  # TPU lane width


def _round_up(n, m):
    return ((n + m - 1) // m) * m


def _mlp_kernel(x_ref, w1_ref, b1_ref, w2_ref, b2_ref, out_ref):
    # x: (B, D_in), w1: (D_in, H_pad), b1: (1, H_pad),
    # w2: (H_pad, A_pad), b2: (1, A_pad)  — all lane-aligned.
    x = x_ref[...]
    h = jnp.dot(x, w1_ref[...], preferred_element_type=jnp.float32) + b1_ref[...]
    h = jnp.maximum(h, 0.0)                                   # ReLU
    q = jnp.dot(h, w2_ref[...], preferred_element_type=jnp.float32) + b2_ref[...]
    out_ref[...] = q.astype(out_ref.dtype)                    # lane-dense store (A_pad = k*128)


def prepare_params(w1, b1, w2, b2):
    """One-time parameter layout for the kernel (hoisted out of the hot path).

    PyTorch conventions in:  w1 (30, input_size), b1 (30,), w2 (nb_action, 30), b2 (nb_action,)
    Kernel layout out:       w1_t (d_in, H_pad) f32, b1 (1, H_pad) f32,
                             w2_t (H_pad, A_pad) f32, b2 (1, A_pad) f32,
    where H_pad / A_pad are the hidden / action dims rounded up to multiples of
    128 (lane-aligned MXU operands, lane-dense output).  Zero padding is exact:
    padded hidden lanes see b1=0 -> relu(0)=0 and zero w2 rows; padded action
    lanes are sliced off by the wrapper.
    """
    hidden = w1.shape[0]
    d_in = w1.shape[1]
    nb_action = w2.shape[0]
    h_pad = _round_up(hidden, LANE)
    a_pad = _round_up(nb_action, LANE)

    w1_t = jnp.zeros((d_in, h_pad), jnp.float32)
    w1_t = w1_t.at[:, :hidden].set(jnp.asarray(w1, jnp.float32).T)        # (d_in, H_pad)
    b1_2d = jnp.zeros((1, h_pad), jnp.float32)
    b1_2d = b1_2d.at[:, :hidden].set(jnp.asarray(b1, jnp.float32))        # (1, H_pad)
    w2_t = jnp.zeros((h_pad, a_pad), jnp.float32)
    w2_t = w2_t.at[:hidden, :nb_action].set(jnp.asarray(w2, jnp.float32).T)  # (H_pad, A_pad)
    b2_2d = jnp.zeros((1, a_pad), jnp.float32)
    b2_2d = b2_2d.at[:, :nb_action].set(jnp.asarray(b2, jnp.float32))     # (1, A_pad)

    return {"w1_t": w1_t, "b1": b1_2d, "w2_t": w2_t, "b2": b2_2d}


@functools.partial(jax.jit, static_argnames=("nb_action",))
def network_forward(state, params, nb_action):
    """state: (B, input_size), params from prepare_params.
    Returns (B, nb_action) f32 — same math as the PyTorch forward.

    Jitted: the pallas_call and the narrowing slice fuse into one dispatch.
    """
    w1_t, b1_2d, w2_t, b2_2d = params["w1_t"], params["b1"], params["w2_t"], params["b2"]
    state = state.astype(jnp.float32)  # guard the boundary dtype
    B, d_in = state.shape
    h_pad = w1_t.shape[1]
    a_pad = w2_t.shape[1]

    full = lambda shape: pl.BlockSpec(shape, lambda: tuple(0 for _ in shape))

    q_pad = pl.pallas_call(
        _mlp_kernel,
        out_shape=jax.ShapeDtypeStruct((B, a_pad), jnp.float32),
        grid=(),  # tiny MLP: single program, whole arrays resident in VMEM
        in_specs=[
            full((B, d_in)),
            full((d_in, h_pad)),
            full((1, h_pad)),
            full((h_pad, a_pad)),
            full((1, a_pad)),
        ],
        out_specs=full((B, a_pad)),
    )(state, w1_t, b1_2d, w2_t, b2_2d)

    # Narrow the lane-padded output back to the real action count (fuses under jit).
    return q_pad[:, :nb_action]


def init_params(key, input_size, nb_action, hidden=30):
    """Deterministic init mimicking PyTorch nn.Linear default (U[-1/sqrt(fan_in), +])."""
    k1, k2, k3, k4 = jax.random.split(key, 4)
    bound1 = 1.0 / jnp.sqrt(jnp.float32(input_size))
    bound2 = 1.0 / jnp.sqrt(jnp.float32(hidden))
    w1 = jax.random.uniform(k1, (hidden, input_size), jnp.float32, -bound1, bound1)
    b1 = jax.random.uniform(k2, (hidden,), jnp.float32, -bound1, bound1)
    w2 = jax.random.uniform(k3, (nb_action, hidden), jnp.float32, -bound2, bound2)
    b2 = jax.random.uniform(k4, (nb_action,), jnp.float32, -bound2, bound2)
    return w1, b1, w2, b2


if __name__ == "__main__":
    # input_size=5 (sensors), nb_action=3 (as in the car AI); batch filled to
    # the MXU M tile.  NOTE (v6e/v7x): if B is tunable, prefer multiples of 256
    # to fill the 2x256 MXU M dimension; B=128 is already optimal on v5e.
    B, INPUT_SIZE, NB_ACTION = 128, 5, 3

    key = jax.random.PRNGKey(0)
    k_params, k_state = jax.random.split(key)
    w1, b1, w2, b2 = init_params(k_params, INPUT_SIZE, NB_ACTION)
    state = jax.random.normal(k_state, (B, INPUT_SIZE), jnp.float32)

    # One-time layout prep (hoisted out of the per-step forward path).
    params = prepare_params(w1, b1, w2, b2)
    params = jax.tree_util.tree_map(jax.block_until_ready, params)

    q_values = network_forward(state, params, NB_ACTION)
    q_values = jax.block_until_ready(q_values)

    # Reference check in plain JAX (same math as the PyTorch forward).
    ref = jnp.maximum(state @ w1.T + b1, 0.0) @ w2.T + b2
    assert q_values.shape == (B, NB_ACTION)
    assert jnp.allclose(q_values, ref, atol=1e-5, rtol=1e-5)

    print("KERNEL_OK")
</pallas_src>

<mosaic_0001>
module attributes {stable_mosaic.version = 11 : i64} {
  func.func @_mlp_kernel(%arg0: memref<128x5xf32, #tpu.memory_space<vmem>>, %arg1: memref<5x128xf32, #tpu.memory_space<vmem>>, %arg2: memref<1x128xf32, #tpu.memory_space<vmem>>, %arg3: memref<128x128xf32, #tpu.memory_space<vmem>>, %arg4: memref<1x128xf32, #tpu.memory_space<vmem>>, %arg5: memref<128x128xf32, #tpu.memory_space<vmem>>) attributes {dimension_semantics = [], scalar_prefetch = 0 : i64, scratch_operands = 0 : i64, tpu.core_type = #tpu.core_type<tc>} {
    %c0 = arith.constant 0 : index
    %c0_0 = arith.constant 0 : index
    %0 = vector.load %arg0[%c0, %c0_0] : memref<128x5xf32, #tpu.memory_space<vmem>>, vector<128x5xf32>
    %c0_1 = arith.constant 0 : index
    %c0_2 = arith.constant 0 : index
    %1 = vector.load %arg1[%c0_1, %c0_2] : memref<5x128xf32, #tpu.memory_space<vmem>>, vector<5x128xf32>
    %cst = arith.constant dense<0.000000e+00> : vector<128x128xf32>
    %2 = tpu.matmul %0, %1, %cst {dimension_numbers = #tpu.dot_dimension_numbers<[1], [0], [0], [1], [0, 0, 1, 1], [], []>} : vector<128x5xf32>, vector<5x128xf32>, vector<128x128xf32> -> vector<128x128xf32>
    %c0_3 = arith.constant 0 : index
    %c0_4 = arith.constant 0 : index
    %3 = vector.load %arg2[%c0_3, %c0_4] : memref<1x128xf32, #tpu.memory_space<vmem>>, vector<1x128xf32>
    %4 = vector.broadcast %3 : vector<1x128xf32> to vector<128x128xf32>
    %5 = arith.addf %2, %4 : vector<128x128xf32>
    %cst_5 = arith.constant 0.000000e+00 : f32
    %6 = vector.broadcast %cst_5 : f32 to vector<128x128xf32>
    %7 = arith.maximumf %5, %6 : vector<128x128xf32>
    %c0_6 = arith.constant 0 : index
    %c0_7 = arith.constant 0 : index
    %8 = vector.load %arg3[%c0_6, %c0_7] : memref<128x128xf32, #tpu.memory_space<vmem>>, vector<128x128xf32>
    %cst_8 = arith.constant dense<0.000000e+00> : vector<128x128xf32>
    %9 = tpu.matmul %7, %8, %cst_8 {dimension_numbers = #tpu.dot_dimension_numbers<[1], [0], [0], [1], [0, 0, 1, 1], [], []>} : vector<128x128xf32>, vector<128x128xf32>, vector<128x128xf32> -> vector<128x128xf32>
    %c0_9 = arith.constant 0 : index
    %c0_10 = arith.constant 0 : index
    %10 = vector.load %arg4[%c0_9, %c0_10] : memref<1x128xf32, #tpu.memory_space<vmem>>, vector<1x128xf32>
    %11 = vector.broadcast %10 : vector<1x128xf32> to vector<128x128xf32>
    %12 = arith.addf %9, %11 : vector<128x128xf32>
    %c0_11 = arith.constant 0 : index
    %c0_12 = arith.constant 0 : index
    %13 = vector.load %arg5[%c0_11, %c0_12] : memref<128x128xf32, #tpu.memory_space<vmem>>, vector<128x128xf32>
    tpu.vector_store %arg5[%c0_11, %c0_12], %12 {strides = array<i32>} : memref<128x128xf32, #tpu.memory_space<vmem>>, vector<128x128xf32>,
    return
  }
}

</mosaic_0001>

<llo_original>
// kernel: network_forward.1
$region0: #{network_forward.1}
  #allocation0 [shape = 'u32[]', space=smem, size = 0x4, offset = 0x4, fixed_abs, tag = 'smem constant byte address 0x4 - core index']
  #allocation1 [shape = 'u32[144,128]{1,0:T(1,128)}', space=vmem, size = 0x12000, scoped, tag = 'internal scratch']
  %s0 = inlined_call_operand.vmem [shape: f32[128,5], index: 0, kind: input, shape index: {}]
  %s1 = inlined_call_operand.vmem [shape: f32[5,128], index: 1, kind: input, shape index: {}]
  %s2 = inlined_call_operand.vmem [shape: f32[1,128], index: 2, kind: input, shape index: {}]
  %s3 = inlined_call_operand.vmem [shape: f32[128,128], index: 3, kind: input, shape index: {}]
  %s4 = inlined_call_operand.vmem [shape: f32[1,128], index: 4, kind: input, shape index: {}]
  %s5 = inlined_call_operand.vmem [shape: f32[128,128], index: 5, kind: output, shape index: {}]
  %s6 = sld [smem:[#allocation0]]
  $region30: #{network_forward.1} parent=0
    _
  %s8 = ssub.s32 1, %s6
  %s9 = scalar_select 0, %s8, %s6
  // Predicated region
  $region2: #{network_forward.1} parent=0 // pred_check
    _
  $region3: #{network_forward.1} parent=0 // pred_check_branch
    %11 = sbr.rel (0) target = $region5
  $region4: #{network_forward.1} parent=0 // pred_region
    _
  $region5: #{network_forward.1} parent=0 // pred_fallthru
    _
  // Predicated region
  $region6: #{network_forward.1} parent=0 // pred_check
    _
  $region7: #{network_forward.1} parent=0 // pred_check_branch
    %13 = sbr.rel (0) target = $region9
  $region8: #{network_forward.1} parent=0 // pred_region
    _
  $region9: #{network_forward.1} parent=0 // pred_fallthru
    _
  // Predicated region
  $region10: #{network_forward.1} parent=0 // pred_check
    _
  $region11: #{network_forward.1} parent=0 // pred_check_branch
    %15 = sbr.rel (0) target = $region13
  $region12: #{network_forward.1} parent=0 // pred_region
    _
  $region13: #{network_forward.1} parent=0 // pred_fallthru
    _
  // Predicated region
  $region14: #{network_forward.1} parent=0 // pred_check
    _
  $region15: #{network_forward.1} parent=0 // pred_check_branch
    %17 = sbr.rel (0) target = $region17
  $region16: #{network_forward.1} parent=0 // pred_region
    _
  $region17: #{network_forward.1} parent=0 // pred_fallthru
    _
  // Predicated region
  $region18: #{network_forward.1} parent=0 // pred_check
    _
  $region19: #{network_forward.1} parent=0 // pred_check_branch
    %19 = sbr.rel (0) target = $region21
  $region20: #{network_forward.1} parent=0 // pred_region
    _
  $region21: #{network_forward.1} parent=0 // pred_fallthru
    _
  %v20 = vld [vmem:[%s0] sm:$0xff]
  %v21 = vld [vmem:[%s0 + $0x8] sm:$0xff]
  %v22 = vld [vmem:[%s0 + $0x10] sm:$0xff]
  %v23 = vld [vmem:[%s0 + $0x18] sm:$0xff]
  %v24 = vld [vmem:[%s0 + $0x20] sm:$0xff]
  %v25 = vld [vmem:[%s0 + $0x28] sm:$0xff]
  %v26 = vld [vmem:[%s0 + $0x30] sm:$0xff]
  %v27 = vld [vmem:[%s0 + $0x38] sm:$0xff]
  %v28 = vld [vmem:[%s0 + $0x40] sm:$0xff]
  %v29 = vld [vmem:[%s0 + $0x48] sm:$0xff]
  %v30 = vld [vmem:[%s0 + $0x50] sm:$0xff]
  %v31 = vld [vmem:[%s0 + $0x58] sm:$0xff]
  %v32 = vld [vmem:[%s0 + $0x60] sm:$0xff]
  %v33 = vld [vmem:[%s0 + $0x68] sm:$0xff]
  %v34 = vld [vmem:[%s0 + $0x70] sm:$0xff]
  %v35 = vld [vmem:[%s0 + $0x78] sm:$0xff]
  %v36 = vld [vmem:[%s1] sm:$0x1f]
  %v37 = vld [vmem:[%s2] sm:$0x1]
  %v39 = vlaneseq
  %v40 = vshrl.u32 %v39, 7
  %v41 = vsub.s32 0, %v40
  %v42 = vrot.slane %v37, %v41
  %vm44 = vcmask 39936
  %v46 = vsel %vm44, %v20, 0
  %v49 = vsel %vm44, %v21, 0
  %v52 = vsel %vm44, %v22, 0
  %v55 = vsel %vm44, %v23, 0
  %v58 = vsel %vm44, %v24, 0
  %v61 = vsel %vm44, %v25, 0
  %v64 = vsel %vm44, %v26, 0
  %v67 = vsel %vm44, %v27, 0
  %v70 = vsel %vm44, %v28, 0
  %v73 = vsel %vm44, %v29, 0
  %v76 = vsel %vm44, %v30, 0
  %v79 = vsel %vm44, %v31, 0
  %v82 = vsel %vm44, %v32, 0
  %v85 = vsel %vm44, %v33, 0
  %v88 = vsel %vm44, %v34, 0
  %v91 = vsel %vm44, %v35, 0
  %vm93 = vcmask 1044480
  %v95 = vsel %vm93, %v36, 0
  %97 = vmatprep.subr.mxu0 0.0
  %98 = vmatpush1.msra.mxu0 %v95
  %99 = vmatprep.subr.mxu0 0.0
  %100 = vmatpush1.msra.mxu0 0.0
  %101 = vmatprep.subr.mxu0 0.0
  %102 = vmatpush1.msra.mxu0 0.0
  %103 = vmatprep.subr.mxu0 0.0
  %104 = vmatpush1.msra.mxu0 0.0
  %105 = vmatprep.subr.mxu0 0.0
  %106 = vmatpush1.msra.mxu0 0.0
  %107 = vmatprep.subr.mxu0 0.0
  %108 = vmatpush1.msra.mxu0 0.0
  %109 = vmatprep.subr.mxu0 0.0
  %110 = vmatpush1.msra.mxu0 0.0
  %111 = vmatprep.subr.mxu0 0.0
  %112 = vmatpush1.msra.mxu0 0.0
  %113 = vmatprep.subr.mxu0 0.0
  %114 = vmatpush1.msra.mxu0 0.0
  %115 = vmatprep.subr.mxu0 0.0
  %116 = vmatpush1.msra.mxu0 0.0
  %117 = vmatprep.subr.mxu0 0.0
  %118 = vmatpush1.msra.mxu0 0.0
  %119 = vmatprep.subr.mxu0 0.0
  %120 = vmatpush1.msra.mxu0 0.0
  %121 = vmatprep.subr.mxu0 0.0
  %122 = vmatpush1.msra.mxu0 0.0
  %123 = vmatprep.subr.mxu0 0.0
  %124 = vmatpush1.msra.mxu0 0.0
  %125 = vmatprep.subr.mxu0 0.0
  %126 = vmatpush1.msra.mxu0 0.0
  %127 = vmatprep.subr.mxu0 0.0
  %128 = vmatpush1.msra.mxu0 0.0
  %129 = vmatprep.subr.mxu0 0.0
  %130 = vmatpush1.msra.mxu0 0.0
  %131 = vmatprep.subr.mxu0 0.0
  %132 = vmatpush1.msra.mxu0 0.0
  %133 = vmatprep.subr.mxu0 0.0
  %134 = vmatpush1.msra.mxu0 0.0
  %135 = vmatprep.subr.mxu0 0.0
  %136 = vmatpush1.msra.mxu0 0.0
  %137 = vmatprep.subr.mxu0 0.0
  %138 = vmatpush1.msra.mxu0 0.0
  %139 = vmatprep.subr.mxu0 0.0
  %140 = vmatpush1.msra.mxu0 0.0
  %141 = vmatprep.subr.mxu0 0.0
  %142 = vmatpush1.msra.mxu0 0.0
  %143 = vmatprep.subr.mxu0 0.0
  %144 = vmatpush1.msra.mxu0 0.0
  %145 = vmatprep.subr.mxu0 0.0
  %146 = vmatpush1.msra.mxu0 0.0
  %147 = vmatprep.subr.mxu0 0.0
  %148 = vmatpush1.msra.mxu0 0.0
  %149 = vmatprep.subr.mxu0 0.0
  %150 = vmatpush1.msra.mxu0 0.0
  %151 = vmatprep.subr.mxu0 0.0
  %152 = vmatpush1.msra.mxu0 0.0
  %153 = vmatprep.subr.mxu0 0.0
  %154 = vmatpush1.msra.mxu0 0.0
  %155 = vmatprep.subr.mxu0 0.0
  %156 = vmatpush1.msra.mxu0 0.0
  %157 = vmatprep.subr.mxu0 0.0
  %158 = vmatpush1.msra.mxu0 0.0
  %159 = vmatprep.subr.mxu0 0.0
  %160 = vmatpush1.msra.mxu0 0.0
  %161 = vmatprep.mubr.f32.mxu0 0.0
  %162 = vmatmul.mubr.f32.gmra.mrb[0].mxu0 %v46
  %v163 = vpop.f32.mrb[0].mxu0
  %v164 = vadd.f32 %v42, %v163
  %v165 = vpop.f32.mrb[0].mxu0
  %166 = vmatprep.mubr.f32.mxu0 0.0
  %167 = vmatmul.mubr.f32.gmra.mrb[0].mxu0 %v49
  %v168 = vpop.f32.mrb[0].mxu0
  %v169 = vadd.f32 %v42, %v168
  %v170 = vpop.f32.mrb[0].mxu0
  %171 = vmatprep.mubr.f32.mxu0 0.0
  %172 = vmatmul.mubr.f32.gmra.mrb[0].mxu0 %v52
  %v173 = vpop.f32.mrb[0].mxu0
  %v174 = vadd.f32 %v42, %v173
  %v175 = vpop.f32.mrb[0].mxu0
  %176 = vmatprep.mubr.f32.mxu0 0.0
  %177 = vmatmul.mubr.f32.gmra.mrb[0].mxu0 %v55
  %v178 = vpop.f32.mrb[0].mxu0
  %v179 = vadd.f32 %v42, %v178
  %v180 = vpop.f32.mrb[0].mxu0
  %181 = vmatprep.mubr.f32.mxu0 0.0
  %182 = vmatmul.mubr.f32.gmra.mrb[0].mxu0 %v58
  %v183 = vpop.f32.mrb[0].mxu0
  %v184 = vadd.f32 %v42, %v183
  %v185 = vpop.f32.mrb[0].mxu0
  %186 = vmatprep.mubr.f32.mxu0 0.0
  %187 = vmatmul.mubr.f32.gmra.mrb[0].mxu0 %v61
  %v188 = vpop.f32.mrb[0].mxu0
  %v189 = vadd.f32 %v42, %v188
  %v190 = vpop.f32.mrb[0].mxu0
  %191 = vmatprep.mubr.f32.mxu0 0.0
  %192 = vmatmul.mubr.f32.gmra.mrb[0].mxu0 %v64
  %v193 = vpop.f32.mrb[0].mxu0
  %v194 = vadd.f32 %v42, %v193
  %v195 = vpop.f32.mrb[0].mxu0
  %196 = vmatprep.mubr.f32.mxu0 0.0
  %197 = vmatmul.mubr.f32.gmra.mrb[0].mxu0 %v67
  %v198 = vpop.f32.mrb[0].mxu0
  %v199 = vadd.f32 %v42, %v198
  %v200 = vpop.f32.mrb[0].mxu0
  %201 = vmatprep.mubr.f32.mxu0 0.0
  %202 = vmatmul.mubr.f32.gmra.mrb[0].mxu0 %v70
  %v203 = vpop.f32.mrb[0].mxu0
  %v204 = vadd.f32 %v42, %v203
  %v205 = vpop.f32.mrb[0].mxu0
  %206 = vmatprep.mubr.f32.mxu0 0.0
  %207 = vmatmul.mubr.f32.gmra.mrb[0].mxu0 %v73
  %v208 = vpop.f32.mrb[0].mxu0
  %v209 = vadd.f32 %v42, %v208
  %v210 = vpop.f32.mrb[0].mxu0
  %211 = vmatprep.mubr.f32.mxu0 0.0
  %212 = vmatmul.mubr.f32.gmra.mrb[0].mxu0 %v76
  %v213 = vpop.f32.mrb[0].mxu0
  %v214 = vadd.f32 %v42, %v213
  %v215 = vpop.f32.mrb[0].mxu0
  %216 = vmatprep.mubr.f32.mxu0 0.0
  %217 = vmatmul.mubr.f32.gmra.mrb[0].mxu0 %v79
  %v218 = vpop.f32.mrb[0].mxu0
  %v219 = vadd.f32 %v42, %v218
  %v220 = vpop.f32.mrb[0].mxu0
  %221 = vmatprep.mubr.f32.mxu0 0.0
  %222 = vmatmul.mubr.f32.gmra.mrb[0].mxu0 %v82
  %v223 = vpop.f32.mrb[0].mxu0
  %v224 = vadd.f32 %v42, %v223
  %v225 = vpop.f32.mrb[0].mxu0
  %226 = vmatprep.mubr.f32.mxu0 0.0
  %227 = vmatmul.mubr.f32.gmra.mrb[0].mxu0 %v85
  %v228 = vpop.f32.mrb[0].mxu0
  %v229 = vadd.f32 %v42, %v228
  %v230 = vpop.f32.mrb[0].mxu0
  %231 = vmatprep.mubr.f32.mxu0 0.0
  %232 = vmatmul.mubr.f32.gmra.mrb[0].mxu0 %v88
  %v233 = vpop.f32.mrb[0].mxu0
  %v234 = vadd.f32 %v42, %v233
  %v235 = vpop.f32.mrb[0].mxu0
  %236 = vmatprep.mubr.f32.mxu0 0.0
  %237 = vmatmul.mubr.f32.gmra.mrb[0].mxu0 %v91
  %v238 = vpop.f32.mrb[0].mxu0
  %v239 = vadd.f32 %v42, %v238
  %v240 = vpop.f32.mrb[0].mxu0
  %241 = vdwg.mxu0
  %v242 = vmax.f32 %v164, 0.0
  %v243 = vmax.f32 %v169, 0.0
  %v244 = vmax.f32 %v174, 0.0
  %v245 = vmax.f32 %v179, 0.0
  %v246 = vmax.f32 %v184, 0.0
  %v247 = vmax.f32 %v189, 0.0
  %v248 = vmax.f32 %v194, 0.0
  %v249 = vmax.f32 %v199, 0.0
  %v250 = vmax.f32 %v204, 0.0
  %v251 = vmax.f32 %v209, 0.0
  %v252 = vmax.f32 %v214, 0.0
  %v253 = vmax.f32 %v219, 0.0
  %v254 = vmax.f32 %v224, 0.0
  %v255 = vmax.f32 %v229, 0.0
  %v256 = vmax.f32 %v234, 0.0
  %v257 = vmax.f32 %v239, 0.0
  %v258 = vld [vmem:[%s3] sm:$0xff]
  %v259 = vld [vmem:[%s3 + $0x8] sm:$0xff]
  %v260 = vld [vmem:[%s3 + $0x10] sm:$0xff]
  %v261 = vld [vmem:[%s3 + $0x18] sm:$0xff]
  %v262 = vld [vmem:[%s3 + $0x20] sm:$0xff]
  %v263 = vld [vmem:[%s3 + $0x28] sm:$0xff]
  %v264 = vld [vmem:[%s3 + $0x30] sm:$0xff]
  %v265 = vld [vmem:[%s3 + $0x38] sm:$0xff]
  %v266 = vld [vmem:[%s3 + $0x40] sm:$0xff]
  %v267 = vld [vmem:[%s3 + $0x48] sm:$0xff]
  %v268 = vld [vmem:[%s3 + $0x50] sm:$0xff]
  %v269 = vld [vmem:[%s3 + $0x58] sm:$0xff]
  %v270 = vld [vmem:[%s3 + $0x60] sm:$0xff]
  %v271 = vld [vmem:[%s3 + $0x68] sm:$0xff]
  %v272 = vld [vmem:[%s3 + $0x70] sm:$0xff]
  %v273 = vld [vmem:[%s3 + $0x78] sm:$0xff]
  %v274 = vld [vmem:[%s4] sm:$0x1]
  %v276 = vlaneseq
  %v277 = vshrl.u32 %v276, 7
  %v278 = vsub.s32 0, %v277
  %v279 = vrot.slane %v274, %v278
  %281 = vmatprep.subr.mxu0 0.0
  %282 = vmatpush1.msra.mxu0 %v258
  %283 = vmatprep.subr.mxu0 0.0
  %284 = vmatpush1.msra.mxu0 %v259
  %285 = vmatprep.subr.mxu0 0.0
  %286 = vmatpush1.msra.mxu0 %v260
  %287 = vmatprep.subr.mxu0 0.0
  %288 = vmatpush1.msra.mxu0 %v261
  %289 = vmatprep.subr.mxu0 0.0
  %290 = vmatpush1.msra.mxu0 %v262
  %291 = vmatprep.subr.mxu0 0.0
  %292 = vmatpush1.msra.mxu0 %v263
  %293 = vmatprep.subr.mxu0 0.0
  %294 = vmatpush1.msra.mxu0 %v264
  %295 = vmatprep.subr.mxu0 0.0
  %296 = vmatpush1.msra.mxu0 %v265
  %297 = vmatprep.subr.mxu0 0.0
  %298 = vmatpush1.msra.mxu0 %v266
  %299 = vmatprep.subr.mxu0 0.0
  %300 = vmatpush1.msra.mxu0 %v267
  %301 = vmatprep.subr.mxu0 0.0
  %302 = vmatpush1.msra.mxu0 %v268
  %303 = vmatprep.subr.mxu0 0.0
  %304 = vmatpush1.msra.mxu0 %v269
  %305 = vmatprep.subr.mxu0 0.0
  %306 = vmatpush1.msra.mxu0 %v270
  %307 = vmatprep.subr.mxu0 0.0
  %308 = vmatpush1.msra.mxu0 %v271
  %309 = vmatprep.subr.mxu0 0.0
  %310 = vmatpush1.msra.mxu0 %v272
  %311 = vmatprep.subr.mxu0 0.0
  %312 = vmatpush1.msra.mxu0 %v273
  %313 = vmatprep.subr.mxu0 0.0
  %314 = vmatpush1.msra.mxu0 0.0
  %315 = vmatprep.subr.mxu0 0.0
  %316 = vmatpush1.msra.mxu0 0.0
  %317 = vmatprep.subr.mxu0 0.0
  %318 = vmatpush1.msra.mxu0 0.0
  %319 = vmatprep.subr.mxu0 0.0
  %320 = vmatpush1.msra.mxu0 0.0
  %321 = vmatprep.subr.mxu0 0.0
  %322 = vmatpush1.msra.mxu0 0.0
  %323 = vmatprep.subr.mxu0 0.0
  %324 = vmatpush1.msra.mxu0 0.0
  %325 = vmatprep.subr.mxu0 0.0
  %326 = vmatpush1.msra.mxu0 0.0
  %327 = vmatprep.subr.mxu0 0.0
  %328 = vmatpush1.msra.mxu0 0.0
  %329 = vmatprep.subr.mxu0 0.0
  %330 = vmatpush1.msra.mxu0 0.0
  %331 = vmatprep.subr.mxu0 0.0
  %332 = vmatpush1.msra.mxu0 0.0
  %333 = vmatprep.subr.mxu0 0.0
  %334 = vmatpush1.msra.mxu0 0.0
  %335 = vmatprep.subr.mxu0 0.0
  %336 = vmatpush1.msra.mxu0 0.0
  %337 = vmatprep.subr.mxu0 0.0
  %338 = vmatpush1.msra.mxu0 0.0
  %339 = vmatprep.subr.mxu0 0.0
  %340 = vmatpush1.msra.mxu0 0.0
  %341 = vmatprep.subr.mxu0 0.0
  %342 = vmatpush1.msra.mxu0 0.0
  %343 = vmatprep.subr.mxu0 0.0
  %344 = vmatpush1.msra.mxu0 0.0
  %345 = vmatprep.mubr.f32.mxu0 0.0
  %346 = vmatmul.mubr.f32.gmra.mrb[0].mxu0 %v242
  %v347 = vpop.f32.mrb[0].mxu0
  %v348 = vadd.f32 %v279, %v347
  %v349 = vpop.f32.mrb[0].mxu0
  %350 = vmatprep.mubr.f32.mxu0 0.0
  %351 = vmatmul.mubr.f32.gmra.mrb[0].mxu0 %v243
  %v352 = vpop.f32.mrb[0].mxu0
  %v353 = vadd.f32 %v279, %v352
  %v354 = vpop.f32.mrb[0].mxu0
  %355 = vmatprep.mubr.f32.mxu0 0.0
  %356 = vmatmul.mubr.f32.gmra.mrb[0].mxu0 %v244
  %v357 = vpop.f32.mrb[0].mxu0
  %v358 = vadd.f32 %v279, %v357
  %v359 = vpop.f32.mrb[0].mxu0
  %360 = vmatprep.mubr.f32.mxu0 0.0
  %361 = vmatmul.mubr.f32.gmra.mrb[0].mxu0 %v245
  %v362 = vpop.f32.mrb[0].mxu0
  %v363 = vadd.f32 %v279, %v362
  %v364 = vpop.f32.mrb[0].mxu0
  %365 = vmatprep.mubr.f32.mxu0 0.0
  %366 = vmatmul.mubr.f32.gmra.mrb[0].mxu0 %v246
  %v367 = vpop.f32.mrb[0].mxu0
  %v368 = vadd.f32 %v279, %v367
  %v369 = vpop.f32.mrb[0].mxu0
  %370 = vmatprep.mubr.f32.mxu0 0.0
  %371 = vmatmul.mubr.f32.gmra.mrb[0].mxu0 %v247
  %v372 = vpop.f32.mrb[0].mxu0
  %v373 = vadd.f32 %v279, %v372
  %v374 = vpop.f32.mrb[0].mxu0
  %375 = vmatprep.mubr.f32.mxu0 0.0
  %376 = vmatmul.mubr.f32.gmra.mrb[0].mxu0 %v248
  %v377 = vpop.f32.mrb[0].mxu0
  %v378 = vadd.f32 %v279, %v377
  %v379 = vpop.f32.mrb[0].mxu0
  %380 = vmatprep.mubr.f32.mxu0 0.0
  %381 = vmatmul.mubr.f32.gmra.mrb[0].mxu0 %v249
  %v382 = vpop.f32.mrb[0].mxu0
  %v383 = vadd.f32 %v279, %v382
  %v384 = vpop.f32.mrb[0].mxu0
  %385 = vmatprep.mubr.f32.mxu0 0.0
  %386 = vmatmul.mubr.f32.gmra.mrb[0].mxu0 %v250
  %v387 = vpop.f32.mrb[0].mxu0
  %v388 = vadd.f32 %v279, %v387
  %v389 = vpop.f32.mrb[0].mxu0
  %390 = vmatprep.mubr.f32.mxu0 0.0
  %391 = vmatmul.mubr.f32.gmra.mrb[0].mxu0 %v251
  %v392 = vpop.f32.mrb[0].mxu0
  %v393 = vadd.f32 %v279, %v392
  %v394 = vpop.f32.mrb[0].mxu0
  %395 = vmatprep.mubr.f32.mxu0 0.0
  %396 = vmatmul.mubr.f32.gmra.mrb[0].mxu0 %v252
  %v397 = vpop.f32.mrb[0].mxu0
  %v398 = vadd.f32 %v279, %v397
  %v399 = vpop.f32.mrb[0].mxu0
  %400 = vmatprep.mubr.f32.mxu0 0.0
  %401 = vmatmul.mubr.f32.gmra.mrb[0].mxu0 %v253
  %v402 = vpop.f32.mrb[0].mxu0
  %v403 = vadd.f32 %v279, %v402
  %v404 = vpop.f32.mrb[0].mxu0
  %405 = vmatprep.mubr.f32.mxu0 0.0
  %406 = vmatmul.mubr.f32.gmra.mrb[0].mxu0 %v254
  %v407 = vpop.f32.mrb[0].mxu0
  %v408 = vadd.f32 %v279, %v407
  %v409 = vpop.f32.mrb[0].mxu0
  %410 = vmatprep.mubr.f32.mxu0 0.0
  %411 = vmatmul.mubr.f32.gmra.mrb[0].mxu0 %v255
  %v412 = vpop.f32.mrb[0].mxu0
  %v413 = vadd.f32 %v279, %v412
  %v414 = vpop.f32.mrb[0].mxu0
  %415 = vmatprep.mubr.f32.mxu0 0.0
  %416 = vmatmul.mubr.f32.gmra.mrb[0].mxu0 %v256
  %v417 = vpop.f32.mrb[0].mxu0
  %v418 = vadd.f32 %v279, %v417
  %v419 = vpop.f32.mrb[0].mxu0
  %420 = vmatprep.mubr.f32.mxu0 0.0
  %421 = vmatmul.mubr.f32.gmra.mrb[0].mxu0 %v257
  %v422 = vpop.f32.mrb[0].mxu0
  %v423 = vadd.f32 %v279, %v422
  %v424 = vpop.f32.mrb[0].mxu0
  %425 = vdwg.mxu0
  %426 = vst [vmem:[%s5] sm:$0xff] %v348
  %427 = vst [vmem:[%s5 + $0x8] sm:$0xff] %v353
  %428 = vst [vmem:[%s5 + $0x10] sm:$0xff] %v358
  %429 = vst [vmem:[%s5 + $0x18] sm:$0xff] %v363
  %430 = vst [vmem:[%s5 + $0x20] sm:$0xff] %v368
  %431 = vst [vmem:[%s5 + $0x28] sm:$0xff] %v373
  %432 = vst [vmem:[%s5 + $0x30] sm:$0xff] %v378
  %433 = vst [vmem:[%s5 + $0x38] sm:$0xff] %v383
  %434 = vst [vmem:[%s5 + $0x40] sm:$0xff] %v388
  %435 = vst [vmem:[%s5 + $0x48] sm:$0xff] %v393
  %436 = vst [vmem:[%s5 + $0x50] sm:$0xff] %v398
  %437 = vst [vmem:[%s5 + $0x58] sm:$0xff] %v403
  %438 = vst [vmem:[%s5 + $0x60] sm:$0xff] %v408
  %439 = vst [vmem:[%s5 + $0x68] sm:$0xff] %v413
  %440 = vst [vmem:[%s5 + $0x70] sm:$0xff] %v418
  %441 = vst [vmem:[%s5 + $0x78] sm:$0xff] %v423
  // Predicated region
  $region22: #{network_forward.1} parent=0 // pred_check
    _
  $region23: #{network_forward.1} parent=0 // pred_check_branch
    %443 = sbr.rel (0) target = $region25
  $region24: #{network_forward.1} parent=0 // pred_region
    _
  $region25: #{network_forward.1} parent=0 // pred_fallthru
    _
  // Predicated region
  $region26: #{network_forward.1} parent=0 // pred_check
    _
  $region27: #{network_forward.1} parent=0 // pred_check_branch
    %445 = sbr.rel (0) target = $region29
  $region28: #{network_forward.1} parent=0 // pred_region
    _
  $region29: #{network_forward.1} parent=0 // pred_fallthru
    _

</llo_original>
